<compile_context>
chip_gen: v7x
topology: tpu7x:2x2x1
jax: 0.10.0
libtpu: 0.0.40
codegen_flags: <defaults>
</compile_context>

<pallas_src>
import functools

import jax
import jax.numpy as jnp
import numpy as np
from jax import lax
from jax.experimental import pallas as pl
from jax.experimental.pallas import tpu as pltpu


def _sublane_multiple(dtype) -> int:
    # Sublane tile is 8 rows of 32-bit; sub-32-bit dtypes pack along sublanes.
    itemsize = jnp.dtype(dtype).itemsize
    return 8 * max(1, 4 // itemsize)


def _largest_divisor_leq(n: int, x: int) -> int:
    x = max(1, min(n, x))
    while n % x:
        x -= 1
    return x


def _pick_lane_tile(P: int, cap_lanes: int) -> int:
    """Largest multiple of 128 <= cap_lanes, preferring divisors of P."""
    if cap_lanes >= P:
        return P
    cap = max(128, (cap_lanes // 128) * 128)
    if cap >= P:
        return P
    best = None
    for tp in range(cap, 127, -128):
        if P % tp == 0:
            best = tp
            break
    if best is not None and 2 * best >= cap:
        return best  # lane-dense and divides P -> no padded last tile
    return cap


def _gen_params() -> dict:
    """Per-generation block-byte target and minimum grid-step count."""
    kind = ""
    try:
        kind = jax.devices()[0].device_kind.lower()
    except Exception:
        pass
    if "v7" in kind:
        # 3.2 TB/s HBM drains blocks fast -> step overhead hurts most; also
        # guarantee enough grid steps for both TensorCores.
        return dict(target_bytes=5 << 20, min_steps=4)
    if "v5" in kind:
        # v5e scoped-VMEM default is 16 MiB; keep 4x block comfortably inside
        # (vmem_limit_bytes is also raised below).
        return dict(target_bytes=3 << 20, min_steps=1)
    # v6e / default.
    return dict(target_bytes=4 << 20, min_steps=1)


def _choose_tiles(B: int, rows: int, P: int, itemsize: int,
                  target_bytes: int, min_steps: int):
    """Pick (batch_tile, lane_tile) so each block is ~target_bytes."""
    row_slab = rows * P * itemsize  # one batch element, DMA'd rows, full pixel axis
    if row_slab >= target_bytes and P > 128:
        # Tile the pixel axis.
        cap_lanes = max(128, target_bytes // max(1, rows * itemsize))
        tp = _pick_lane_tile(P, cap_lanes)
        tb = 1
    else:
        # Small image: keep the full pixel axis and tile over batch instead.
        tp = P
        want_tb = max(1, target_bytes // max(1, row_slab))
        tb = _largest_divisor_leq(B, want_tb)

    def n_steps(tb_, tp_):
        return pl.cdiv(B, tb_) * pl.cdiv(P, tp_)

    # Ensure enough grid steps (keeps v7x's second TensorCore busy).
    while n_steps(tb, tp) < min_steps:
        if tb > 1:
            tb = _largest_divisor_leq(B, max(1, tb // 2))
        elif tp > 128:
            half = max(128, ((tp // 2) // 128) * 128)
            if half == tp:
                break
            tp = _pick_lane_tile(P, half)
        else:
            break
    return tb, tp


def _make_offset_kernel(n_kernels: int, block_size: int, tp: int,
                        rows_dma: int):
    n = n_kernels
    is_pow2 = block_size > 0 and (block_size & (block_size - 1)) == 0
    shift = max(block_size.bit_length() - 1, 0)

    def kernel(x_ref, o_ref):
        # Pixel index of each lane in this tile, at lane-vector (1,1,TP) scale.
        base = pl.program_id(1) * tp
        p = base + lax.broadcasted_iota(jnp.int32, (1, 1, tp), 2)
        if is_pow2:
            off_x = (p & (block_size - 1)) * block_size
            off_y = (p >> shift) * block_size
        else:
            off_x = (p % block_size) * block_size
            off_y = (p // block_size) * block_size
        # Exact in f32: offsets < img_size**2 (< 2**24 for img_size <= 4096).
        off_x = off_x.astype(jnp.float32)
        off_y = off_y.astype(jnp.float32)

        # Row-sliced adds: no block-sized iota/select temporaries; the (1,1,TP)
        # offsets broadcast over the batch and sublane axes.
        o_ref[:, :n, :] = (
            x_ref[:, :n, :].astype(jnp.float32) + off_x).astype(o_ref.dtype)
        o_ref[:, n:2 * n, :] = (
            x_ref[:, n:2 * n, :].astype(jnp.float32) + off_y).astype(o_ref.dtype)
        if rows_dma > 2 * n:
            # Pass-through rows pulled in only for sublane alignment.
            o_ref[:, 2 * n:, :] = x_ref[:, 2 * n:, :]

    return kernel


@functools.partial(jax.jit, static_argnames=("n_kernels", "block_size"),
                   donate_argnums=(0,))
def offset_block(x: jax.Array, *, n_kernels: int, block_size: int) -> jax.Array:
    """x: (B, F, P) array, F = 4*n_kernels, P = img_size**2 (lane axis).

    NOTE: the input buffer is donated / aliased to the output (in-place
    semantics, matching the PyTorch module).  Feature rows beyond the DMA'd
    window keep their input values through the alias.
    """
    B, F, P = x.shape
    assert F == 4 * n_kernels, "feature axis must be 4 * n_kernels"

    itemsize = jnp.dtype(x.dtype).itemsize
    sub = _sublane_multiple(x.dtype)
    rows_mod = 2 * n_kernels
    # DMA only the modified rows, rounded up to a sublane multiple.  Extra
    # rows inside the block are copied through in-kernel; rows beyond the
    # block are never DMA'd and survive via input_output_aliases.
    rows_dma = min(F, ((rows_mod + sub - 1) // sub) * sub)

    gp = _gen_params()
    tb, tp = _choose_tiles(B, rows_dma, P, itemsize,
                           gp["target_bytes"], gp["min_steps"])
    block_bytes = tb * rows_dma * tp * itemsize
    grid = (pl.cdiv(B, tb), pl.cdiv(P, tp))

    kernel = _make_offset_kernel(n_kernels, block_size, tp, rows_dma)
    spec = pl.BlockSpec((tb, rows_dma, tp), lambda b, t: (b, 0, t))

    # Double-buffered input + output = 4x block; add headroom, stay well below
    # v7x's 64 MiB physical VMEM.
    vmem_limit = int(min(48 << 20, max(16 << 20, 4 * block_bytes + (8 << 20))))

    return pl.pallas_call(
        kernel,
        out_shape=jax.ShapeDtypeStruct((B, F, P), x.dtype),
        grid_spec=pltpu.PrefetchScalarGridSpec(
            num_scalar_prefetch=0,
            grid=grid,
            in_specs=[spec],
            out_specs=spec,
        ),
        # Output 0 aliases input 0: feature rows [rows_dma, 4n) are never
        # DMA'd and keep their input values through the alias.
        input_output_aliases={0: 0},
        compiler_params=pltpu.CompilerParams(
            dimension_semantics=("parallel", "parallel"),
            vmem_limit_bytes=vmem_limit,
        ),
    )(x)


def offset_block_ref(x, *, n_kernels, block_size):
    """Pure-JAX reference mirroring the PyTorch forward."""
    B, F, P = x.shape
    loc = jnp.arange(P, dtype=jnp.int32)
    off_x = (block_size * (loc % block_size)).astype(jnp.float32)   # (P,)
    off_y = (block_size * (loc // block_size)).astype(jnp.float32)  # (P,)
    f = jnp.arange(F)
    is_x = (f < n_kernels)[None, :, None]
    is_y = ((f >= n_kernels) & (f < 2 * n_kernels))[None, :, None]
    xf = x.astype(jnp.float32)
    out = jnp.where(is_x, xf + off_x[None, None, :],
                    jnp.where(is_y, xf + off_y[None, None, :], xf))
    return out.astype(x.dtype)


if __name__ == "__main__":
    configs = [
        # Small, module-consistent shapes.
        dict(batch=2, n_kernels=4, block_size=8, img_size=16),   # F=16, P=256
        # Unaligned modified-row count (2n=6 -> rounded up to 8 rows DMA'd)
        # and P=144 (not a multiple of 128): exercises row rounding, in-block
        # pass-through copy, and padded-lane handling.
        dict(batch=3, n_kernels=3, block_size=8, img_size=12),   # F=12, P=144
    ]

    key = jax.random.PRNGKey(0)
    for cfg in configs:
        nk, bs = cfg["n_kernels"], cfg["block_size"]
        F, P = 4 * nk, cfg["img_size"] ** 2
        key, sk = jax.random.split(key)
        x = jax.random.normal(sk, (cfg["batch"], F, P), dtype=jnp.float32)
        x_np = np.asarray(x)  # host copy: x's buffer is donated to the kernel

        # Compute the reference FIRST: the kernel donates / aliases x's buffer.
        ref = jax.block_until_ready(
            offset_block_ref(x, n_kernels=nk, block_size=bs))
        out = jax.block_until_ready(
            offset_block(x, n_kernels=nk, block_size=bs))

        assert out.shape == (cfg["batch"], F, P)
        assert jnp.allclose(out, ref, atol=1e-5, rtol=1e-5), "mismatch vs reference"
        # Rows [2n, 4n) must pass through untouched (alias-preserved rows).
        assert np.allclose(np.asarray(out)[:, 2 * nk:, :],
                           x_np[:, 2 * nk:, :]), "pass-through rows corrupted"

    print("KERNEL_OK")
</pallas_src>

<mosaic_0001>
module attributes {stable_mosaic.version = 11 : i64} {
  func.func @kernel(%arg0: i32, %arg1: i32, %arg2: memref<2x8x256xf32, #tpu.memory_space<vmem>>, %arg3: memref<2x8x256xf32, #tpu.memory_space<vmem>>) attributes {dimension_semantics = [#tpu.dimension_semantics<parallel>, #tpu.dimension_semantics<parallel>], iteration_bounds = array<i64: 1, 1>, scalar_prefetch = 0 : i64, scratch_operands = 0 : i64, tpu.core_type = #tpu.core_type<tc>, window_params = [{transform_indices = @transform_0, window_bounds = array<i64: 2, 8, 256>}, {transform_indices = @transform_1, window_bounds = array<i64: 2, 8, 256>}]} {
    %c256_i32 = arith.constant 256 : i32
    %0 = arith.muli %arg1, %c256_i32 : i32
    %1 = tpu.iota {dimensions = array<i32: 2>} : vector<1x1x256xi32>
    %2 = vector.broadcast %0 : i32 to vector<1x1x256xi32>
    %3 = arith.addi %2, %1 : vector<1x1x256xi32>
    %c7_i32 = arith.constant 7 : i32
    %4 = vector.broadcast %c7_i32 : i32 to vector<1x1x256xi32>
    %5 = arith.andi %3, %4 : vector<1x1x256xi32>
    %c8_i32 = arith.constant 8 : i32
    %6 = vector.broadcast %c8_i32 : i32 to vector<1x1x256xi32>
    %7 = arith.muli %5, %6 : vector<1x1x256xi32>
    %c3_i32 = arith.constant 3 : i32
    %8 = vector.broadcast %c3_i32 : i32 to vector<1x1x256xi32>
    %9 = arith.shrsi %3, %8 : vector<1x1x256xi32>
    %c8_i32_0 = arith.constant 8 : i32
    %10 = vector.broadcast %c8_i32_0 : i32 to vector<1x1x256xi32>
    %11 = arith.muli %9, %10 : vector<1x1x256xi32>
    %12 = arith.sitofp %7 : vector<1x1x256xi32> to vector<1x1x256xf32>
    %13 = arith.sitofp %11 : vector<1x1x256xi32> to vector<1x1x256xf32>
    %c0 = arith.constant 0 : index
    %c0_1 = arith.constant 0 : index
    %c0_2 = arith.constant 0 : index
    %14 = vector.load %arg2[%c0, %c0_1, %c0_2] : memref<2x8x256xf32, #tpu.memory_space<vmem>>, vector<2x4x256xf32>
    %15 = vector.broadcast %12 : vector<1x1x256xf32> to vector<2x4x256xf32>
    %16 = arith.addf %14, %15 : vector<2x4x256xf32>
    %c0_3 = arith.constant 0 : index
    %c0_4 = arith.constant 0 : index
    %c0_5 = arith.constant 0 : index
    %17 = vector.load %arg3[%c0_3, %c0_4, %c0_5] : memref<2x8x256xf32, #tpu.memory_space<vmem>>, vector<2x4x256xf32>
    tpu.vector_store %arg3[%c0_3, %c0_4, %c0_5], %16 {strides = array<i32>} : memref<2x8x256xf32, #tpu.memory_space<vmem>>, vector<2x4x256xf32>,
    %c0_6 = arith.constant 0 : index
    %c4 = arith.constant 4 : index
    %c0_7 = arith.constant 0 : index
    %18 = vector.load %arg2[%c0_6, %c4, %c0_7] : memref<2x8x256xf32, #tpu.memory_space<vmem>>, vector<2x4x256xf32>
    %19 = vector.broadcast %13 : vector<1x1x256xf32> to vector<2x4x256xf32>
    %20 = arith.addf %18, %19 : vector<2x4x256xf32>
    %c0_8 = arith.constant 0 : index
    %c4_9 = arith.constant 4 : index
    %c0_10 = arith.constant 0 : index
    %21 = vector.load %arg3[%c0_8, %c4_9, %c0_10] : memref<2x8x256xf32, #tpu.memory_space<vmem>>, vector<2x4x256xf32>
    tpu.vector_store %arg3[%c0_8, %c4_9, %c0_10], %20 {strides = array<i32>} : memref<2x8x256xf32, #tpu.memory_space<vmem>>, vector<2x4x256xf32>,
    return
  }
  func.func @transform_0(%arg0: i32, %arg1: i32) -> (i32, i32, i32) {
    %c0_i32 = arith.constant 0 : i32
    %c0_i32_0 = arith.constant 0 : i32
    return %arg0, %c0_i32, %arg1 : i32, i32, i32
  }
  func.func @transform_1(%arg0: i32, %arg1: i32) -> (i32, i32, i32) {
    %c0_i32 = arith.constant 0 : i32
    %c0_i32_0 = arith.constant 0 : i32
    return %arg0, %c0_i32, %arg1 : i32, i32, i32
  }
}

</mosaic_0001>

<llo_original>
// kernel: offset_block.1
$region0: #{offset_block.1}
  #allocation0 [shape = 'u32[]', space=smem, size = 0x4, offset = 0x4, fixed_abs, tag = 'smem constant byte address 0x4 - core index']
  #allocation1 [shape = 'u32[144,128]{1,0:T(1,128)}', space=vmem, size = 0x12000, scoped, tag = 'internal scratch']
  %s0 = inlined_call_operand.hbm [shape: f32[2,16,256], index: 0, kind: input, shape index: {}, may-alias: {0,1}]
  %s1 = inlined_call_operand.hbm [shape: f32[2,16,256], index: 1, kind: output, shape index: {}, may-alias: {0,1}]
  %s2 = sld [smem:[#allocation0]]
  $region18: #{offset_block.1} parent=0
    _
  %s4 = ssub.s32 1, %s2
  %s5 = scalar_select 0, %s4, %s2
  $region1: #{offset_block.1} parent=0
    #allocation2 [shape = 'u8[16384]{0}', space=vmem, size = 0x4000, scoped, tag = 'input window, operand 0, single buffered']
    #allocation3 [shape = 's32[1]{0}', space=sflag, size = 0x4, scoped, tag = 'scoped memory for offset_block.1']
    #allocation4 [shape = 's32[1]{0}', space=sflag, size = 0x4, scoped, tag = 'scoped memory for offset_block.1']
    #allocation5 [shape = 'u8[16384]{0}', space=vmem, size = 0x4000, scoped, tag = 'output window, operand 0, single buffered']
    %6 = vsyncpa [#allocation3], 0
    %7 = vsyncpa [#allocation4], 0
    // Predicated region
    $region2: #{offset_block.1} parent=1 // pred_check
      _
    $region3: #{offset_block.1} parent=1 // pred_check_branch
      %9 = sbr.rel (0) target = $region5
    $region4: #{offset_block.1} parent=1 // pred_region
      %s11 = ssub.s32 512, 512
      %12 = vsyncadd [#allocation3], %s11
      %s13 = sshll.u32 [#allocation2], 4
      %s14 = int_to_ptr.vmem [resolvable:$true] %s13
      %19 = dma.hbm_to_vmem [thread:$0]  %s0, 512, %s14, [#allocation3], 512, 256, 16
    $region5: #{offset_block.1} parent=1 // pred_fallthru
      _
    // Predicated region
    $region6: #{offset_block.1} parent=1 // pred_check
      _
    $region7: #{offset_block.1} parent=1 // pred_check_branch
      %21 = sbr.rel (0) target = $region9
    $region8: #{offset_block.1} parent=1 // pred_region
      %22 = dma.done [#allocation3], 512
    $region9: #{offset_block.1} parent=1 // pred_fallthru
      _
    %s23 = smul.u32 0, 256
    %v24 = vlaneseq
    %v25 = vand.u32 %v24, 127
    %v26 = vadd.s32 %v25, 128
    %v27 = vstv %s23
    %v28 = vadd.s32 %v27, %v25
    %v29 = vadd.s32 %v27, %v26
    %v30 = vand.u32 %v28, 7
    %v31 = vand.u32 %v29, 7
    %v32 = vmul.u32 %v30, 8
    %v33 = vmul.u32 %v31, 8
    %v34 = vshra.s32 %v28, 3
    %v35 = vshra.s32 %v29, 3
    %v36 = vmul.u32 %v34, 8
    %v37 = vmul.u32 %v35, 8
    %v38 = vcvt.s32.f32 %v32
    %v39 = vcvt.s32.f32 %v33
    %v40 = vcvt.s32.f32 %v36
    %v41 = vcvt.s32.f32 %v37
    %v42 = vld [vmem:[#allocation2] sm:$0xf]
    %v43 = vld [vmem:[#allocation2 + $0x8] sm:$0xf]
    %v44 = vld [vmem:[#allocation2 + $0x10] sm:$0xf]
    %v45 = vld [vmem:[#allocation2 + $0x18] sm:$0xf]
    %v46 = vadd.f32 %v42, %v38
    %v47 = vadd.f32 %v43, %v39
    %v48 = vadd.f32 %v44, %v38
    %v49 = vadd.f32 %v45, %v39
    %50 = vst [vmem:[#allocation5] sm:$0xf] %v46
    %51 = vst [vmem:[#allocation5 + $0x8] sm:$0xf] %v47
    %52 = vst [vmem:[#allocation5 + $0x10] sm:$0xf] %v48
    %53 = vst [vmem:[#allocation5 + $0x18] sm:$0xf] %v49
    %v54 = vld [vmem:[#allocation2] sm:$0xf0]
    %v55 = vld [vmem:[#allocation2 + $0x8] sm:$0xf0]
    %v56 = vld [vmem:[#allocation2 + $0x10] sm:$0xf0]
    %v57 = vld [vmem:[#allocation2 + $0x18] sm:$0xf0]
    %v58 = vadd.f32 %v54, %v40
    %v59 = vadd.f32 %v55, %v41
    %v60 = vadd.f32 %v56, %v40
    %v61 = vadd.f32 %v57, %v41
    %62 = vst [vmem:[#allocation5] sm:$0xf0] %v58
    %63 = vst [vmem:[#allocation5 + $0x8] sm:$0xf0] %v59
    %64 = vst [vmem:[#allocation5 + $0x10] sm:$0xf0] %v60
    %65 = vst [vmem:[#allocation5 + $0x18] sm:$0xf0] %v61
    // Predicated region
    $region10: #{offset_block.1} parent=1 // pred_check
      _
    $region11: #{offset_block.1} parent=1 // pred_check_branch
      %67 = sbr.rel (0) target = $region13
    $region12: #{offset_block.1} parent=1 // pred_region
      %s69 = ssub.s32 512, 512
      %70 = vsyncadd [#allocation4], %s69
      %s71 = sshll.u32 [#allocation5], 4
      %s72 = int_to_ptr.vmem [resolvable:$true] %s71
      %77 = dma.vmem_to_hbm [thread:$0]  %s72, 512, %s1, [#allocation4], 256, 512, 16
    $region13: #{offset_block.1} parent=1 // pred_fallthru
      _
    // Predicated region
    $region14: #{offset_block.1} parent=1 // pred_check
      _
    $region15: #{offset_block.1} parent=1 // pred_check_branch
      %79 = sbr.rel (0) target = $region17
    $region16: #{offset_block.1} parent=1 // pred_region
      %80 = dma.done [#allocation4], 512
    $region17: #{offset_block.1} parent=1 // pred_fallthru
      _
    %81 = vsyncpa [#allocation3], 1
    %82 = vsyncpa [#allocation4], 1

</llo_original>
